<compile_context>
chip_gen: v7x
topology: tpu7x:2x2x1
jax: 0.10.0
libtpu: 0.0.40
codegen_flags: <defaults>
</compile_context>

<pallas_src>
from functools import partial

import jax
import jax.numpy as jnp
from jax import lax
from jax.experimental import pallas as pl
from jax.experimental.pallas import tpu as pltpu


def embed_attention_kernel(x_ref, w_ref, b_ref, wc_ref, bc_ref, cent_ref,
                           att_ref, vlad_ref, *, d_feat, nb, pixels,
                           unroll_conv, flat_vlad):
    # One grid step == `nb` batch elements, all folded onto the lane axis.
    x = x_ref[0]                                          # (C, Nb*P) f32
    c_in = x.shape[0]
    ncols = x.shape[1]
    w = w_ref[...]                                        # (D+Ca, C)

    # ---- base_model: fused 1x1 convs (feature rows first, then attention) --
    if unroll_conv:
        # Tiny contraction depth C: broadcast-FMA on the VPU instead of a
        # near-empty MXU pass whose drain would gate the softmax chain.
        res = w[:, 0:1] * x[0:1, :]
        for c in range(1, c_in):                          # static unroll over C
            res = res + w[:, c:c + 1] * x[c:c + 1, :]
        res = res + b_ref[...]
    else:
        res = jnp.dot(w.astype(jnp.bfloat16), x.astype(jnp.bfloat16),
                      preferred_element_type=jnp.float32) + b_ref[...]

    feat = jnp.maximum(res[:d_feat], 0.0)                 # (D, Nb*P)  ReLU branch
    att_ref[0] = res[d_feat:]                             # (Ca, Nb*P) lane-dense

    # ---- net_vlad: soft assignment (bf16 MXU operands, f32 accumulate) -----
    feat_bf = feat.astype(jnp.bfloat16)
    logits = jnp.dot(wc_ref[...].astype(jnp.bfloat16), feat_bf,
                     preferred_element_type=jnp.float32) + bc_ref[...]  # (K, Nb*P)
    logits = logits - jnp.max(logits, axis=0, keepdims=True)
    e = jnp.exp(logits)
    a = e * pl.reciprocal(jnp.sum(e, axis=0, keepdims=True), approx=True)
    a_bf = a.astype(jnp.bfloat16)                         # (K, Nb*P)

    # Ones row folds a_sum into the aggregation matmul (result column D).
    feat_aug = jnp.concatenate(
        [feat_bf, jnp.ones((1, ncols), jnp.bfloat16)], axis=0)        # (D+1, Nb*P)

    # ---- net_vlad aggregation + wrapper normalizations ---------------------
    cent = cent_ref[...]                                  # (K, D)
    n_clusters = cent.shape[0]
    # F.normalize's eps=1e-12 applied to the *squared* norm (identical clamp).
    eps2 = 1e-24
    rows = []
    for n in range(nb):                                   # static unroll, nb small
        lo = n * pixels
        agg = lax.dot_general(a_bf[:, lo:lo + pixels], feat_aug[:, lo:lo + pixels],
                              dimension_numbers=(((1,), (1,)), ((), ())),
                              preferred_element_type=jnp.float32)     # (K, D+1)
        vlad = agg[:, :d_feat] - agg[:, d_feat:d_feat + 1] * cent     # (K, D)
        intra_inv = lax.rsqrt(jnp.maximum(
            jnp.sum(vlad * vlad, axis=-1, keepdims=True), eps2))
        intra = vlad * intra_inv                                      # intra-norm
        g_inv = lax.rsqrt(jnp.maximum(jnp.sum(intra * intra), eps2))  # global norm
        rows.append(intra * g_inv)
    stacked = jnp.concatenate(rows, axis=0)               # (Nb*K, D)
    if flat_vlad:
        # Lane-dense (K*D is a multiple of 128) unmasked store; row-major
        # flatten matches PyTorch's .view(N, -1).
        vlad_ref[0] = stacked.reshape(nb, n_clusters * d_feat)
    else:
        vlad_ref[0] = stacked.reshape(nb, n_clusters, d_feat)


def embed_attention_forward(x_nchw, params, *, steps=None):
    """Forward pass of EmbedAttentionNet (useSemantics=False).

    params = (wb, bb, wa, ba, wc, bc, cent):
      wb (C, D), bb (1, D): base_model feature branch (1x1 conv, ReLU'd)
      wa (C, Ca), ba (1, Ca): base_model attention branch (1x1 conv, raw)
      wc (D, K), bc (1, K):  net_vlad soft-assignment 1x1 conv
      cent (K, D):           net_vlad centroids
    """
    wb, bb, wa, ba, wc, bc, cent = params
    N, C, H, W = x_nchw.shape
    P = H * W
    D = wb.shape[1]
    Ca = wa.shape[1]
    K = wc.shape[1]

    if steps is None:
        # v7x has 2 TensorCores/chip -> one "parallel" grid step per core;
        # single-TC chips (v5e/v6e) run the whole batch in one step.
        steps = 2 if "v7" in jax.devices()[0].device_kind.lower() else 1
    if steps < 1 or N % steps != 0:
        steps = 1
    nb = N // steps

    # ---- glue: tiny one-time repacking (a few KB; no big activation moves) -
    x_fold = (x_nchw.reshape(steps, nb, C, P)
              .transpose(0, 2, 1, 3)
              .reshape(steps, C, nb * P))                 # batch folded onto lanes
    w_t = jnp.concatenate([wb.T, wa.T], axis=0)           # (D+Ca, C) fused conv w
    b_t = jnp.concatenate([bb.T, ba.T], axis=0)           # (D+Ca, 1) fused conv b
    wc_t = wc.T                                           # (K, D)
    bc_t = bc.T                                           # (K, 1)

    cost = pl.CostEstimate(
        flops=2 * N * P * (C * (D + Ca) + D * K + (D + 1) * K),
        transcendentals=N * K * P,                        # exp in the softmax
        bytes_accessed=4 * (x_fold.size + w_t.size + b_t.size + wc_t.size
                            + bc_t.size + cent.size + N * Ca * P + N * K * D),
    )

    def call(flat_vlad):
        vlad_shape = (steps, nb, K * D) if flat_vlad else (steps, nb, K, D)
        vlad_block = (1, nb, K * D) if flat_vlad else (1, nb, K, D)
        vlad_idx = (lambda g: (g, 0, 0)) if flat_vlad else (lambda g: (g, 0, 0, 0))
        return pl.pallas_call(
            partial(embed_attention_kernel, d_feat=D, nb=nb, pixels=P,
                    unroll_conv=(C <= 8), flat_vlad=flat_vlad),
            out_shape=(jax.ShapeDtypeStruct((steps, Ca, nb * P), jnp.float32),
                       jax.ShapeDtypeStruct(vlad_shape, jnp.float32)),
            grid=(steps,),
            in_specs=[
                pl.BlockSpec((1, C, nb * P), lambda g: (g, 0, 0)),   # x (P on lanes)
                pl.BlockSpec((D + Ca, C), lambda g: (0, 0)),         # fused conv w
                pl.BlockSpec((D + Ca, 1), lambda g: (0, 0)),         # fused conv b
                pl.BlockSpec((K, D), lambda g: (0, 0)),              # assignment w
                pl.BlockSpec((K, 1), lambda g: (0, 0)),              # assignment b
                pl.BlockSpec((K, D), lambda g: (0, 0)),              # centroids
            ],
            out_specs=(pl.BlockSpec((1, Ca, nb * P), lambda g: (g, 0, 0)),
                       pl.BlockSpec(vlad_block, vlad_idx)),
            compiler_params=pltpu.CompilerParams(
                dimension_semantics=("parallel",)),
            cost_estimate=cost,
        )(x_fold, w_t, b_t, wc_t, bc_t, cent)

    try:
        att3, vlad_out = call(flat_vlad=True)
        jax.block_until_ready(vlad_out)
    except Exception:
        # Some Mosaic versions cannot lower the in-kernel (K, D) -> (K*D,)
        # sublane->lane flatten; fall back to a (.., K, D) store and flatten
        # in the wrapper instead.  Functionally identical.
        att3, vlad_out = call(flat_vlad=False)

    # att: (steps, Ca, nb*P) -> (N, Ca, H, W);  vlad: (...) -> (N, K*D)
    att_mask = (att3.reshape(steps, Ca, nb, H, W)
                .transpose(0, 2, 1, 3, 4)
                .reshape(N, Ca, H, W))
    vlad_flat = vlad_out.reshape(N, K * D)
    return att_mask, vlad_flat


def _reference_forward(x_nchw, params):
    """Pure-JAX reference mirroring the PyTorch semantics (high-precision f32)."""
    wb, bb, wa, ba, wc, bc, cent = params
    N, C, H, W = x_nchw.shape
    with jax.default_matmul_precision("highest"):
        x = jnp.transpose(x_nchw, (0, 2, 3, 1)).reshape(N, H * W, C)
        att = x @ wa + ba[0]
        feat = jnp.maximum(x @ wb + bb[0], 0.0)
        logits = feat @ wc + bc[0]
        a = jax.nn.softmax(logits, axis=-1)
        agg = jnp.einsum("npk,npd->nkd", a, feat)
        vlad = agg - jnp.sum(a, axis=1)[:, :, None] * cent[None]
        eps = 1e-12
        vlad = vlad / jnp.maximum(
            jnp.linalg.norm(vlad, axis=-1, keepdims=True), eps)
        flat = vlad.reshape(N, -1)
        flat = flat / jnp.maximum(
            jnp.linalg.norm(flat, axis=-1, keepdims=True), eps)
        att_mask = jnp.transpose(att.reshape(N, H, W, -1), (0, 3, 1, 2))
    return att_mask, flat


if __name__ == "__main__":
    N, C, H, W = 2, 4, 16, 16   # input image batch (NCHW, like PyTorch)
    D, K, Ca = 32, 8, 4         # feature dim, VLAD clusters, attention channels

    key = jax.random.PRNGKey(0)
    ks = jax.random.split(key, 8)
    x = jax.random.normal(ks[0], (N, C, H, W), jnp.float32)
    wb = 0.1 * jax.random.normal(ks[1], (C, D), jnp.float32)
    bb = 0.1 * jax.random.normal(ks[2], (1, D), jnp.float32)
    wa = 0.1 * jax.random.normal(ks[3], (C, Ca), jnp.float32)
    ba = 0.1 * jax.random.normal(ks[4], (1, Ca), jnp.float32)
    wc = 0.1 * jax.random.normal(ks[5], (D, K), jnp.float32)
    bc = 0.1 * jax.random.normal(ks[6], (1, K), jnp.float32)
    cent = jax.random.normal(ks[7], (K, D), jnp.float32)
    params = (wb, bb, wa, ba, wc, bc, cent)

    att_mask, vlad = embed_attention_forward(x, params)
    jax.block_until_ready((att_mask, vlad))

    ref_att, ref_vlad = _reference_forward(x, params)
    # Attention branch is computed in f32 on the VPU -> tight tolerance.
    assert jnp.allclose(att_mask, ref_att, rtol=1e-4, atol=1e-5)
    # VLAD path uses bf16 MXU operands + approx reciprocal -> relaxed tolerance.
    assert jnp.allclose(vlad, ref_vlad, rtol=2e-2, atol=2e-3)

    print("KERNEL_OK")
</pallas_src>

<mosaic_0001>
module attributes {stable_mosaic.version = 11 : i64} {
  func.func @embed_attention_kernel(%arg0: i32, %arg1: memref<1x4x512xf32, #tpu.memory_space<vmem>>, %arg2: memref<36x4xf32, #tpu.memory_space<vmem>>, %arg3: memref<36x1xf32, #tpu.memory_space<vmem>>, %arg4: memref<8x32xf32, #tpu.memory_space<vmem>>, %arg5: memref<8x1xf32, #tpu.memory_space<vmem>>, %arg6: memref<8x32xf32, #tpu.memory_space<vmem>>, %arg7: memref<1x4x512xf32, #tpu.memory_space<vmem>>, %arg8: memref<1x2x256xf32, #tpu.memory_space<vmem>>) attributes {dimension_semantics = [#tpu.dimension_semantics<parallel>], iteration_bounds = array<i64: 1>, scalar_prefetch = 0 : i64, scratch_operands = 0 : i64, tpu.core_type = #tpu.core_type<tc>, window_params = [{transform_indices = @transform_0, window_bounds = array<i64: 1, 4, 512>}, {pipeline_mode = #tpu.pipeline_mode<synchronous>, transform_indices = @transform_1, window_bounds = array<i64: 36, 4>}, {pipeline_mode = #tpu.pipeline_mode<synchronous>, transform_indices = @transform_2, window_bounds = array<i64: 36, 1>}, {pipeline_mode = #tpu.pipeline_mode<synchronous>, transform_indices = @transform_3, window_bounds = array<i64: 8, 32>}, {pipeline_mode = #tpu.pipeline_mode<synchronous>, transform_indices = @transform_4, window_bounds = array<i64: 8, 1>}, {pipeline_mode = #tpu.pipeline_mode<synchronous>, transform_indices = @transform_5, window_bounds = array<i64: 8, 32>}, {transform_indices = @transform_6, window_bounds = array<i64: 1, 4, 512>}, {transform_indices = @transform_7, window_bounds = array<i64: 1, 2, 256>}]} {
    %c0 = arith.constant 0 : index
    %c0_0 = arith.constant 0 : index
    %c0_1 = arith.constant 0 : index
    %0 = vector.load %arg1[%c0, %c0_0, %c0_1] : memref<1x4x512xf32, #tpu.memory_space<vmem>>, vector<1x4x512xf32>
    %1 = vector.shape_cast %0 : vector<1x4x512xf32> to vector<4x512xf32>
    %c0_2 = arith.constant 0 : index
    %c0_3 = arith.constant 0 : index
    %2 = vector.load %arg2[%c0_2, %c0_3] : memref<36x4xf32, #tpu.memory_space<vmem>>, vector<36x4xf32>
    %3 = vector.extract_strided_slice %2 {offsets = [0, 0], sizes = [36, 1], strides = [1, 1]} : vector<36x4xf32> to vector<36x1xf32>
    %4 = vector.extract_strided_slice %1 {offsets = [0, 0], sizes = [1, 512], strides = [1, 1]} : vector<4x512xf32> to vector<1x512xf32>
    %5 = vector.broadcast %3 : vector<36x1xf32> to vector<36x512xf32>
    %6 = vector.broadcast %4 : vector<1x512xf32> to vector<36x512xf32>
    %7 = arith.mulf %5, %6 : vector<36x512xf32>
    %8 = vector.extract_strided_slice %2 {offsets = [0, 1], sizes = [36, 1], strides = [1, 1]} : vector<36x4xf32> to vector<36x1xf32>
    %9 = vector.extract_strided_slice %1 {offsets = [1, 0], sizes = [1, 512], strides = [1, 1]} : vector<4x512xf32> to vector<1x512xf32>
    %10 = vector.broadcast %8 : vector<36x1xf32> to vector<36x512xf32>
    %11 = vector.broadcast %9 : vector<1x512xf32> to vector<36x512xf32>
    %12 = arith.mulf %10, %11 : vector<36x512xf32>
    %13 = arith.addf %7, %12 : vector<36x512xf32>
    %14 = vector.extract_strided_slice %2 {offsets = [0, 2], sizes = [36, 1], strides = [1, 1]} : vector<36x4xf32> to vector<36x1xf32>
    %15 = vector.extract_strided_slice %1 {offsets = [2, 0], sizes = [1, 512], strides = [1, 1]} : vector<4x512xf32> to vector<1x512xf32>
    %16 = vector.broadcast %14 : vector<36x1xf32> to vector<36x512xf32>
    %17 = vector.broadcast %15 : vector<1x512xf32> to vector<36x512xf32>
    %18 = arith.mulf %16, %17 : vector<36x512xf32>
    %19 = arith.addf %13, %18 : vector<36x512xf32>
    %20 = vector.extract_strided_slice %2 {offsets = [0, 3], sizes = [36, 1], strides = [1, 1]} : vector<36x4xf32> to vector<36x1xf32>
    %21 = vector.extract_strided_slice %1 {offsets = [3, 0], sizes = [1, 512], strides = [1, 1]} : vector<4x512xf32> to vector<1x512xf32>
    %22 = vector.broadcast %20 : vector<36x1xf32> to vector<36x512xf32>
    %23 = vector.broadcast %21 : vector<1x512xf32> to vector<36x512xf32>
    %24 = arith.mulf %22, %23 : vector<36x512xf32>
    %25 = arith.addf %19, %24 : vector<36x512xf32>
    %c0_4 = arith.constant 0 : index
    %c0_5 = arith.constant 0 : index
    %26 = vector.load %arg3[%c0_4, %c0_5] : memref<36x1xf32, #tpu.memory_space<vmem>>, vector<36x1xf32>
    %27 = vector.broadcast %26 : vector<36x1xf32> to vector<36x512xf32>
    %28 = arith.addf %25, %27 : vector<36x512xf32>
    %29 = vector.extract_strided_slice %28 {offsets = [0, 0], sizes = [32, 512], strides = [1, 1]} : vector<36x512xf32> to vector<32x512xf32>
    %cst = arith.constant 0.000000e+00 : f32
    %30 = vector.broadcast %cst : f32 to vector<32x512xf32>
    %31 = arith.maximumf %29, %30 : vector<32x512xf32>
    %32 = vector.extract_strided_slice %28 {offsets = [32, 0], sizes = [4, 512], strides = [1, 1]} : vector<36x512xf32> to vector<4x512xf32>
    %c0_6 = arith.constant 0 : index
    %c0_7 = arith.constant 0 : index
    %c0_8 = arith.constant 0 : index
    %33 = vector.load %arg7[%c0_6, %c0_7, %c0_8] : memref<1x4x512xf32, #tpu.memory_space<vmem>>, vector<1x4x512xf32>
    %34 = vector.shape_cast %33 : vector<1x4x512xf32> to vector<4x512xf32>
    %35 = vector.shape_cast %32 : vector<4x512xf32> to vector<1x4x512xf32>
    tpu.vector_store %arg7[%c0_6, %c0_7, %c0_8], %35 {strides = array<i32>} : memref<1x4x512xf32, #tpu.memory_space<vmem>>, vector<1x4x512xf32>,
    %36 = arith.truncf %31 : vector<32x512xf32> to vector<32x512xbf16>
    %c0_9 = arith.constant 0 : index
    %c0_10 = arith.constant 0 : index
    %37 = vector.load %arg4[%c0_9, %c0_10] : memref<8x32xf32, #tpu.memory_space<vmem>>, vector<8x32xf32>
    %38 = arith.truncf %37 : vector<8x32xf32> to vector<8x32xbf16>
    %cst_11 = arith.constant dense<0.000000e+00> : vector<8x512xf32>
    %39 = tpu.matmul %38, %36, %cst_11 {dimension_numbers = #tpu.dot_dimension_numbers<[1], [0], [0], [1], [0, 0, 1, 1], [], []>} : vector<8x32xbf16>, vector<32x512xbf16>, vector<8x512xf32> -> vector<8x512xf32>
    %c0_12 = arith.constant 0 : index
    %c0_13 = arith.constant 0 : index
    %40 = vector.load %arg5[%c0_12, %c0_13] : memref<8x1xf32, #tpu.memory_space<vmem>>, vector<8x1xf32>
    %41 = vector.broadcast %40 : vector<8x1xf32> to vector<8x512xf32>
    %42 = arith.addf %39, %41 : vector<8x512xf32>
    %cst_14 = arith.constant dense<0xFF800000> : vector<512xf32>
    %43 = vector.multi_reduction <maximumf>, %42, %cst_14 [0] : vector<8x512xf32> to vector<512xf32>
    %44 = vector.shape_cast %43 : vector<512xf32> to vector<1x512xf32>
    %45 = vector.broadcast %44 : vector<1x512xf32> to vector<8x512xf32>
    %46 = arith.subf %42, %45 : vector<8x512xf32>
    %47 = math.exp %46 : vector<8x512xf32>
    %cst_15 = arith.constant dense<0.000000e+00> : vector<512xf32>
    %48 = vector.multi_reduction <add>, %47, %cst_15 [0] : vector<8x512xf32> to vector<512xf32>
    %49 = vector.shape_cast %48 : vector<512xf32> to vector<1x512xf32>
    %50 = tpu.reciprocal %49 {approx = true} : vector<1x512xf32> -> vector<1x512xf32>
    %51 = vector.broadcast %50 : vector<1x512xf32> to vector<8x512xf32>
    %52 = arith.mulf %47, %51 : vector<8x512xf32>
    %53 = arith.truncf %52 : vector<8x512xf32> to vector<8x512xbf16>
    %cst_16 = arith.constant 1.000000e+00 : bf16
    %54 = vector.broadcast %cst_16 : bf16 to vector<1x512xbf16>
    %55 = tpu.concatenate %36, %54 in 0 : vector<32x512xbf16>, vector<1x512xbf16> -> vector<33x512xbf16>
    %c0_17 = arith.constant 0 : index
    %c0_18 = arith.constant 0 : index
    %56 = vector.load %arg6[%c0_17, %c0_18] : memref<8x32xf32, #tpu.memory_space<vmem>>, vector<8x32xf32>
    %57 = vector.extract_strided_slice %53 {offsets = [0, 0], sizes = [8, 256], strides = [1, 1]} : vector<8x512xbf16> to vector<8x256xbf16>
    %58 = vector.extract_strided_slice %55 {offsets = [0, 0], sizes = [33, 256], strides = [1, 1]} : vector<33x512xbf16> to vector<33x256xbf16>
    %cst_19 = arith.constant dense<0.000000e+00> : vector<8x33xf32>
    %59 = tpu.matmul %57, %58, %cst_19 {dimension_numbers = #tpu.dot_dimension_numbers<[1], [1], [0], [0], [0, 0, 1, 0], [], []>} : vector<8x256xbf16>, vector<33x256xbf16>, vector<8x33xf32> -> vector<8x33xf32>
    %60 = vector.extract_strided_slice %59 {offsets = [0, 0], sizes = [8, 32], strides = [1, 1]} : vector<8x33xf32> to vector<8x32xf32>
    %61 = vector.extract_strided_slice %59 {offsets = [0, 32], sizes = [8, 1], strides = [1, 1]} : vector<8x33xf32> to vector<8x1xf32>
    %62 = vector.broadcast %61 : vector<8x1xf32> to vector<8x32xf32>
    %63 = arith.mulf %62, %56 : vector<8x32xf32>
    %64 = arith.subf %60, %63 : vector<8x32xf32>
    %65 = arith.mulf %64, %64 : vector<8x32xf32>
    %cst_20 = arith.constant dense<0.000000e+00> : vector<8xf32>
    %66 = vector.multi_reduction <add>, %65, %cst_20 [1] : vector<8x32xf32> to vector<8xf32>
    %67 = vector.shape_cast %66 : vector<8xf32> to vector<8x1xf32>
    %cst_21 = arith.constant 1.000000e-24 : f32
    %68 = vector.broadcast %cst_21 : f32 to vector<8x1xf32>
    %69 = arith.maximumf %67, %68 : vector<8x1xf32>
    %70 = math.rsqrt %69 : vector<8x1xf32>
    %71 = vector.broadcast %70 : vector<8x1xf32> to vector<8x32xf32>
    %72 = arith.mulf %64, %71 : vector<8x32xf32>
    %73 = arith.mulf %72, %72 : vector<8x32xf32>
    %74 = vector.shape_cast %73 : vector<8x32xf32> to vector<1x8x32xf32>
    %cst_22 = arith.constant dense<0.000000e+00> : vector<1xf32>
    %75 = vector.multi_reduction <add>, %74, %cst_22 [1, 2] : vector<1x8x32xf32> to vector<1xf32>
    %76 = vector.shape_cast %75 : vector<1xf32> to vector<1x1x1xf32>
    %77 = vector.extract %76[0, 0, 0] : f32 from vector<1x1x1xf32>
    %cst_23 = arith.constant 1.000000e-24 : f32
    %78 = arith.maximumf %77, %cst_23 : f32
    %79 = math.rsqrt %78 : f32
    %80 = vector.broadcast %79 : f32 to vector<8x32xf32>
    %81 = arith.mulf %72, %80 : vector<8x32xf32>
    %82 = vector.extract_strided_slice %53 {offsets = [0, 256], sizes = [8, 256], strides = [1, 1]} : vector<8x512xbf16> to vector<8x256xbf16>
    %83 = vector.extract_strided_slice %55 {offsets = [0, 256], sizes = [33, 256], strides = [1, 1]} : vector<33x512xbf16> to vector<33x256xbf16>
    %cst_24 = arith.constant dense<0.000000e+00> : vector<8x33xf32>
    %84 = tpu.matmul %82, %83, %cst_24 {dimension_numbers = #tpu.dot_dimension_numbers<[1], [1], [0], [0], [0, 0, 1, 0], [], []>} : vector<8x256xbf16>, vector<33x256xbf16>, vector<8x33xf32> -> vector<8x33xf32>
    %85 = vector.extract_strided_slice %84 {offsets = [0, 0], sizes = [8, 32], strides = [1, 1]} : vector<8x33xf32> to vector<8x32xf32>
    %86 = vector.extract_strided_slice %84 {offsets = [0, 32], sizes = [8, 1], strides = [1, 1]} : vector<8x33xf32> to vector<8x1xf32>
    %87 = vector.broadcast %86 : vector<8x1xf32> to vector<8x32xf32>
    %88 = arith.mulf %87, %56 : vector<8x32xf32>
    %89 = arith.subf %85, %88 : vector<8x32xf32>
    %90 = arith.mulf %89, %89 : vector<8x32xf32>
    %cst_25 = arith.constant dense<0.000000e+00> : vector<8xf32>
    %91 = vector.multi_reduction <add>, %90, %cst_25 [1] : vector<8x32xf32> to vector<8xf32>
    %92 = vector.shape_cast %91 : vector<8xf32> to vector<8x1xf32>
    %cst_26 = arith.constant 1.000000e-24 : f32
    %93 = vector.broadcast %cst_26 : f32 to vector<8x1xf32>
    %94 = arith.maximumf %92, %93 : vector<8x1xf32>
    %95 = math.rsqrt %94 : vector<8x1xf32>
    %96 = vector.broadcast %95 : vector<8x1xf32> to vector<8x32xf32>
    %97 = arith.mulf %89, %96 : vector<8x32xf32>
    %98 = arith.mulf %97, %97 : vector<8x32xf32>
    %99 = vector.shape_cast %98 : vector<8x32xf32> to vector<1x8x32xf32>
    %cst_27 = arith.constant dense<0.000000e+00> : vector<1xf32>
    %100 = vector.multi_reduction <add>, %99, %cst_27 [1, 2] : vector<1x8x32xf32> to vector<1xf32>
    %101 = vector.shape_cast %100 : vector<1xf32> to vector<1x1x1xf32>
    %102 = vector.extract %101[0, 0, 0] : f32 from vector<1x1x1xf32>
    %cst_28 = arith.constant 1.000000e-24 : f32
    %103 = arith.maximumf %102, %cst_28 : f32
    %104 = math.rsqrt %103 : f32
    %105 = vector.broadcast %104 : f32 to vector<8x32xf32>
    %106 = arith.mulf %97, %105 : vector<8x32xf32>
    %107 = tpu.concatenate %81, %106 in 0 : vector<8x32xf32>, vector<8x32xf32> -> vector<16x32xf32>
    %108 = vector.shape_cast %107 : vector<16x32xf32> to vector<2x256xf32>
    %c0_29 = arith.constant 0 : index
    %c0_30 = arith.constant 0 : index
    %c0_31 = arith.constant 0 : index
    %109 = vector.load %arg8[%c0_29, %c0_30, %c0_31] : memref<1x2x256xf32, #tpu.memory_space<vmem>>, vector<1x2x256xf32>
    %110 = vector.shape_cast %109 : vector<1x2x256xf32> to vector<2x256xf32>
    %111 = vector.shape_cast %108 : vector<2x256xf32> to vector<1x2x256xf32>
    tpu.vector_store %arg8[%c0_29, %c0_30, %c0_31], %111 {strides = array<i32>} : memref<1x2x256xf32, #tpu.memory_space<vmem>>, vector<1x2x256xf32>,
    return
  }
  func.func @transform_0(%arg0: i32) -> (i32, i32, i32) {
    %c0_i32 = arith.constant 0 : i32
    %c0_i32_0 = arith.constant 0 : i32
    %c0_i32_1 = arith.constant 0 : i32
    return %arg0, %c0_i32, %c0_i32_0 : i32, i32, i32
  }
  func.func @transform_1(%arg0: i32) -> (i32, i32) {
    %c0_i32 = arith.constant 0 : i32
    %c0_i32_0 = arith.constant 0 : i32
    %c0_i32_1 = arith.constant 0 : i32
    return %c0_i32, %c0_i32_0 : i32, i32
  }
  func.func @transform_2(%arg0: i32) -> (i32, i32) {
    %c0_i32 = arith.constant 0 : i32
    %c0_i32_0 = arith.constant 0 : i32
    %c0_i32_1 = arith.constant 0 : i32
    return %c0_i32, %c0_i32_0 : i32, i32
  }
  func.func @transform_3(%arg0: i32) -> (i32, i32) {
    %c0_i32 = arith.constant 0 : i32
    %c0_i32_0 = arith.constant 0 : i32
    %c0_i32_1 = arith.constant 0 : i32
    return %c0_i32, %c0_i32_0 : i32, i32
  }
  func.func @transform_4(%arg0: i32) -> (i32, i32) {
    %c0_i32 = arith.constant 0 : i32
    %c0_i32_0 = arith.constant 0 : i32
    %c0_i32_1 = arith.constant 0 : i32
    return %c0_i32, %c0_i32_0 : i32, i32
  }
  func.func @transform_5(%arg0: i32) -> (i32, i32) {
    %c0_i32 = arith.constant 0 : i32
    %c0_i32_0 = arith.constant 0 : i32
    %c0_i32_1 = arith.constant 0 : i32
    return %c0_i32, %c0_i32_0 : i32, i32
  }
  func.func @transform_6(%arg0: i32) -> (i32, i32, i32) {
    %c0_i32 = arith.constant 0 : i32
    %c0_i32_0 = arith.constant 0 : i32
    %c0_i32_1 = arith.constant 0 : i32
    return %arg0, %c0_i32, %c0_i32_0 : i32, i32, i32
  }
  func.func @transform_7(%arg0: i32) -> (i32, i32, i32) {
    %c0_i32 = arith.constant 0 : i32
    %c0_i32_0 = arith.constant 0 : i32
    %c0_i32_1 = arith.constant 0 : i32
    return %arg0, %c0_i32, %c0_i32_0 : i32, i32, i32
  }
}

module attributes {stable_mosaic.version = 11 : i64} {
  func.func @embed_attention_kernel(%arg0: i32, %arg1: memref<1x4x512xf32, #tpu.memory_space<vmem>>, %arg2: memref<36x4xf32, #tpu.memory_space<vmem>>, %arg3: memref<36x1xf32, #tpu.memory_space<vmem>>, %arg4: memref<8x32xf32, #tpu.memory_space<vmem>>, %arg5: memref<8x1xf32, #tpu.memory_space<vmem>>, %arg6: memref<8x32xf32, #tpu.memory_space<vmem>>, %arg7: memref<1x4x512xf32, #tpu.memory_space<vmem>>, %arg8: memref<1x2x8x32xf32, #tpu.memory_space<vmem>>) attributes {dimension_semantics = [#tpu.dimension_semantics<parallel>], iteration_bounds = array<i64: 1>, scalar_prefetch = 0 : i64, scratch_operands = 0 : i64, tpu.core_type = #tpu.core_type<tc>, window_params = [{transform_indices = @transform_0, window_bounds = array<i64: 1, 4, 512>}, {pipeline_mode = #tpu.pipeline_mode<synchronous>, transform_indices = @transform_1, window_bounds = array<i64: 36, 4>}, {pipeline_mode = #tpu.pipeline_mode<synchronous>, transform_indices = @transform_2, window_bounds = array<i64: 36, 1>}, {pipeline_mode = #tpu.pipeline_mode<synchronous>, transform_indices = @transform_3, window_bounds = array<i64: 8, 32>}, {pipeline_mode = #tpu.pipeline_mode<synchronous>, transform_indices = @transform_4, window_bounds = array<i64: 8, 1>}, {pipeline_mode = #tpu.pipeline_mode<synchronous>, transform_indices = @transform_5, window_bounds = array<i64: 8, 32>}, {transform_indices = @transform_6, window_bounds = array<i64: 1, 4, 512>}, {transform_indices = @transform_7, window_bounds = array<i64: 1, 2, 8, 32>}]} {
    %c0 = arith.constant 0 : index
    %c0_0 = arith.constant 0 : index
    %c0_1 = arith.constant 0 : index
    %0 = vector.load %arg1[%c0, %c0_0, %c0_1] : memref<1x4x512xf32, #tpu.memory_space<vmem>>, vector<1x4x512xf32>
    %1 = vector.shape_cast %0 : vector<1x4x512xf32> to vector<4x512xf32>
    %c0_2 = arith.constant 0 : index
    %c0_3 = arith.constant 0 : index
    %2 = vector.load %arg2[%c0_2, %c0_3] : memref<36x4xf32, #tpu.memory_space<vmem>>, vector<36x4xf32>
    %3 = vector.extract_strided_slice %2 {offsets = [0, 0], sizes = [36, 1], strides = [1, 1]} : vector<36x4xf32> to vector<36x1xf32>
    %4 = vector.extract_strided_slice %1 {offsets = [0, 0], sizes = [1, 512], strides = [1, 1]} : vector<4x512xf32> to vector<1x512xf32>
    %5 = vector.broadcast %3 : vector<36x1xf32> to vector<36x512xf32>
    %6 = vector.broadcast %4 : vector<1x512xf32> to vector<36x512xf32>
    %7 = arith.mulf %5, %6 : vector<36x512xf32>
    %8 = vector.extract_strided_slice %2 {offsets = [0, 1], sizes = [36, 1], strides = [1, 1]} : vector<36x4xf32> to vector<36x1xf32>
    %9 = vector.extract_strided_slice %1 {offsets = [1, 0], sizes = [1, 512], strides = [1, 1]} : vector<4x512xf32> to vector<1x512xf32>
    %10 = vector.broadcast %8 : vector<36x1xf32> to vector<36x512xf32>
    %11 = vector.broadcast %9 : vector<1x512xf32> to vector<36x512xf32>
    %12 = arith.mulf %10, %11 : vector<36x512xf32>
    %13 = arith.addf %7, %12 : vector<36x512xf32>
    %14 = vector.extract_strided_slice %2 {offsets = [0, 2], sizes = [36, 1], strides = [1, 1]} : vector<36x4xf32> to vector<36x1xf32>
    %15 = vector.extract_strided_slice %1 {offsets = [2, 0], sizes = [1, 512], strides = [1, 1]} : vector<4x512xf32> to vector<1x512xf32>
    %16 = vector.broadcast %14 : vector<36x1xf32> to vector<36x512xf32>
    %17 = vector.broadcast %15 : vector<1x512xf32> to vector<36x512xf32>
    %18 = arith.mulf %16, %17 : vector<36x512xf32>
    %19 = arith.addf %13, %18 : vector<36x512xf32>
    %20 = vector.extract_strided_slice %2 {offsets = [0, 3], sizes = [36, 1], strides = [1, 1]} : vector<36x4xf32> to vector<36x1xf32>
    %21 = vector.extract_strided_slice %1 {offsets = [3, 0], sizes = [1, 512], strides = [1, 1]} : vector<4x512xf32> to vector<1x512xf32>
    %22 = vector.broadcast %20 : vector<36x1xf32> to vector<36x512xf32>
    %23 = vector.broadcast %21 : vector<1x512xf32> to vector<36x512xf32>
    %24 = arith.mulf %22, %23 : vector<36x512xf32>
    %25 = arith.addf %19, %24 : vector<36x512xf32>
    %c0_4 = arith.constant 0 : index
    %c0_5 = arith.constant 0 : index
    %26 = vector.load %arg3[%c0_4, %c0_5] : memref<36x1xf32, #tpu.memory_space<vmem>>, vector<36x1xf32>
    %27 = vector.broadcast %26 : vector<36x1xf32> to vector<36x512xf32>
    %28 = arith.addf %25, %27 : vector<36x512xf32>
    %29 = vector.extract_strided_slice %28 {offsets = [0, 0], sizes = [32, 512], strides = [1, 1]} : vector<36x512xf32> to vector<32x512xf32>
    %cst = arith.constant 0.000000e+00 : f32
    %30 = vector.broadcast %cst : f32 to vector<32x512xf32>
    %31 = arith.maximumf %29, %30 : vector<32x512xf32>
    %32 = vector.extract_strided_slice %28 {offsets = [32, 0], sizes = [4, 512], strides = [1, 1]} : vector<36x512xf32> to vector<4x512xf32>
    %c0_6 = arith.constant 0 : index
    %c0_7 = arith.constant 0 : index
    %c0_8 = arith.constant 0 : index
    %33 = vector.load %arg7[%c0_6, %c0_7, %c0_8] : memref<1x4x512xf32, #tpu.memory_space<vmem>>, vector<1x4x512xf32>
    %34 = vector.shape_cast %33 : vector<1x4x512xf32> to vector<4x512xf32>
    %35 = vector.shape_cast %32 : vector<4x512xf32> to vector<1x4x512xf32>
    tpu.vector_store %arg7[%c0_6, %c0_7, %c0_8], %35 {strides = array<i32>} : memref<1x4x512xf32, #tpu.memory_space<vmem>>, vector<1x4x512xf32>,
    %36 = arith.truncf %31 : vector<32x512xf32> to vector<32x512xbf16>
    %c0_9 = arith.constant 0 : index
    %c0_10 = arith.constant 0 : index
    %37 = vector.load %arg4[%c0_9, %c0_10] : memref<8x32xf32, #tpu.memory_space<vmem>>, vector<8x32xf32>
    %38 = arith.truncf %37 : vector<8x32xf32> to vector<8x32xbf16>
    %cst_11 = arith.constant dense<0.000000e+00> : vector<8x512xf32>
    %39 = tpu.matmul %38, %36, %cst_11 {dimension_numbers = #tpu.dot_dimension_numbers<[1], [0], [0], [1], [0, 0, 1, 1], [], []>} : vector<8x32xbf16>, vector<32x512xbf16>, vector<8x512xf32> -> vector<8x512xf32>
    %c0_12 = arith.constant 0 : index
    %c0_13 = arith.constant 0 : index
    %40 = vector.load %arg5[%c0_12, %c0_13] : memref<8x1xf32, #tpu.memory_space<vmem>>, vector<8x1xf32>
    %41 = vector.broadcast %40 : vector<8x1xf32> to vector<8x512xf32>
    %42 = arith.addf %39, %41 : vector<8x512xf32>
    %cst_14 = arith.constant dense<0xFF800000> : vector<512xf32>
    %43 = vector.multi_reduction <maximumf>, %42, %cst_14 [0] : vector<8x512xf32> to vector<512xf32>
    %44 = vector.shape_cast %43 : vector<512xf32> to vector<1x512xf32>
    %45 = vector.broadcast %44 : vector<1x512xf32> to vector<8x512xf32>
    %46 = arith.subf %42, %45 : vector<8x512xf32>
    %47 = math.exp %46 : vector<8x512xf32>
    %cst_15 = arith.constant dense<0.000000e+00> : vector<512xf32>
    %48 = vector.multi_reduction <add>, %47, %cst_15 [0] : vector<8x512xf32> to vector<512xf32>
    %49 = vector.shape_cast %48 : vector<512xf32> to vector<1x512xf32>
    %50 = tpu.reciprocal %49 {approx = true} : vector<1x512xf32> -> vector<1x512xf32>
    %51 = vector.broadcast %50 : vector<1x512xf32> to vector<8x512xf32>
    %52 = arith.mulf %47, %51 : vector<8x512xf32>
    %53 = arith.truncf %52 : vector<8x512xf32> to vector<8x512xbf16>
    %cst_16 = arith.constant 1.000000e+00 : bf16
    %54 = vector.broadcast %cst_16 : bf16 to vector<1x512xbf16>
    %55 = tpu.concatenate %36, %54 in 0 : vector<32x512xbf16>, vector<1x512xbf16> -> vector<33x512xbf16>
    %c0_17 = arith.constant 0 : index
    %c0_18 = arith.constant 0 : index
    %56 = vector.load %arg6[%c0_17, %c0_18] : memref<8x32xf32, #tpu.memory_space<vmem>>, vector<8x32xf32>
    %57 = vector.extract_strided_slice %53 {offsets = [0, 0], sizes = [8, 256], strides = [1, 1]} : vector<8x512xbf16> to vector<8x256xbf16>
    %58 = vector.extract_strided_slice %55 {offsets = [0, 0], sizes = [33, 256], strides = [1, 1]} : vector<33x512xbf16> to vector<33x256xbf16>
    %cst_19 = arith.constant dense<0.000000e+00> : vector<8x33xf32>
    %59 = tpu.matmul %57, %58, %cst_19 {dimension_numbers = #tpu.dot_dimension_numbers<[1], [1], [0], [0], [0, 0, 1, 0], [], []>} : vector<8x256xbf16>, vector<33x256xbf16>, vector<8x33xf32> -> vector<8x33xf32>
    %60 = vector.extract_strided_slice %59 {offsets = [0, 0], sizes = [8, 32], strides = [1, 1]} : vector<8x33xf32> to vector<8x32xf32>
    %61 = vector.extract_strided_slice %59 {offsets = [0, 32], sizes = [8, 1], strides = [1, 1]} : vector<8x33xf32> to vector<8x1xf32>
    %62 = vector.broadcast %61 : vector<8x1xf32> to vector<8x32xf32>
    %63 = arith.mulf %62, %56 : vector<8x32xf32>
    %64 = arith.subf %60, %63 : vector<8x32xf32>
    %65 = arith.mulf %64, %64 : vector<8x32xf32>
    %cst_20 = arith.constant dense<0.000000e+00> : vector<8xf32>
    %66 = vector.multi_reduction <add>, %65, %cst_20 [1] : vector<8x32xf32> to vector<8xf32>
    %67 = vector.shape_cast %66 : vector<8xf32> to vector<8x1xf32>
    %cst_21 = arith.constant 1.000000e-24 : f32
    %68 = vector.broadcast %cst_21 : f32 to vector<8x1xf32>
    %69 = arith.maximumf %67, %68 : vector<8x1xf32>
    %70 = math.rsqrt %69 : vector<8x1xf32>
    %71 = vector.broadcast %70 : vector<8x1xf32> to vector<8x32xf32>
    %72 = arith.mulf %64, %71 : vector<8x32xf32>
    %73 = arith.mulf %72, %72 : vector<8x32xf32>
    %74 = vector.shape_cast %73 : vector<8x32xf32> to vector<1x8x32xf32>
    %cst_22 = arith.constant dense<0.000000e+00> : vector<1xf32>
    %75 = vector.multi_reduction <add>, %74, %cst_22 [1, 2] : vector<1x8x32xf32> to vector<1xf32>
    %76 = vector.shape_cast %75 : vector<1xf32> to vector<1x1x1xf32>
    %77 = vector.extract %76[0, 0, 0] : f32 from vector<1x1x1xf32>
    %cst_23 = arith.constant 1.000000e-24 : f32
    %78 = arith.maximumf %77, %cst_23 : f32
    %79 = math.rsqrt %78 : f32
    %80 = vector.broadcast %79 : f32 to vector<8x32xf32>
    %81 = arith.mulf %72, %80 : vector<8x32xf32>
    %82 = vector.extract_strided_slice %53 {offsets = [0, 256], sizes = [8, 256], strides = [1, 1]} : vector<8x512xbf16> to vector<8x256xbf16>
    %83 = vector.extract_strided_slice %55 {offsets = [0, 256], sizes = [33, 256], strides = [1, 1]} : vector<33x512xbf16> to vector<33x256xbf16>
    %cst_24 = arith.constant dense<0.000000e+00> : vector<8x33xf32>
    %84 = tpu.matmul %82, %83, %cst_24 {dimension_numbers = #tpu.dot_dimension_numbers<[1], [1], [0], [0], [0, 0, 1, 0], [], []>} : vector<8x256xbf16>, vector<33x256xbf16>, vector<8x33xf32> -> vector<8x33xf32>
    %85 = vector.extract_strided_slice %84 {offsets = [0, 0], sizes = [8, 32], strides = [1, 1]} : vector<8x33xf32> to vector<8x32xf32>
    %86 = vector.extract_strided_slice %84 {offsets = [0, 32], sizes = [8, 1], strides = [1, 1]} : vector<8x33xf32> to vector<8x1xf32>
    %87 = vector.broadcast %86 : vector<8x1xf32> to vector<8x32xf32>
    %88 = arith.mulf %87, %56 : vector<8x32xf32>
    %89 = arith.subf %85, %88 : vector<8x32xf32>
    %90 = arith.mulf %89, %89 : vector<8x32xf32>
    %cst_25 = arith.constant dense<0.000000e+00> : vector<8xf32>
    %91 = vector.multi_reduction <add>, %90, %cst_25 [1] : vector<8x32xf32> to vector<8xf32>
    %92 = vector.shape_cast %91 : vector<8xf32> to vector<8x1xf32>
    %cst_26 = arith.constant 1.000000e-24 : f32
    %93 = vector.broadcast %cst_26 : f32 to vector<8x1xf32>
    %94 = arith.maximumf %92, %93 : vector<8x1xf32>
    %95 = math.rsqrt %94 : vector<8x1xf32>
    %96 = vector.broadcast %95 : vector<8x1xf32> to vector<8x32xf32>
    %97 = arith.mulf %89, %96 : vector<8x32xf32>
    %98 = arith.mulf %97, %97 : vector<8x32xf32>
    %99 = vector.shape_cast %98 : vector<8x32xf32> to vector<1x8x32xf32>
    %cst_27 = arith.constant dense<0.000000e+00> : vector<1xf32>
    %100 = vector.multi_reduction <add>, %99, %cst_27 [1, 2] : vector<1x8x32xf32> to vector<1xf32>
    %101 = vector.shape_cast %100 : vector<1xf32> to vector<1x1x1xf32>
    %102 = vector.extract %101[0, 0, 0] : f32 from vector<1x1x1xf32>
    %cst_28 = arith.constant 1.000000e-24 : f32
    %103 = arith.maximumf %102, %cst_28 : f32
    %104 = math.rsqrt %103 : f32
    %105 = vector.broadcast %104 : f32 to vector<8x32xf32>
    %106 = arith.mulf %97, %105 : vector<8x32xf32>
    %107 = tpu.concatenate %81, %106 in 0 : vector<8x32xf32>, vector<8x32xf32> -> vector<16x32xf32>
    %108 = vector.shape_cast %107 : vector<16x32xf32> to vector<2x8x32xf32>
    %c0_29 = arith.constant 0 : index
    %c0_30 = arith.constant 0 : index
    %c0_31 = arith.constant 0 : index
    %c0_32 = arith.constant 0 : index
    %109 = vector.load %arg8[%c0_29, %c0_30, %c0_31, %c0_32] : memref<1x2x8x32xf32, #tpu.memory_space<vmem>>, vector<1x2x8x32xf32>
    %110 = vector.shape_cast %109 : vector<1x2x8x32xf32> to vector<2x8x32xf32>
    %111 = vector.shape_cast %108 : vector<2x8x32xf32> to vector<1x2x8x32xf32>
    tpu.vector_store %arg8[%c0_29, %c0_30, %c0_31, %c0_32], %111 {strides = array<i32>} : memref<1x2x8x32xf32, #tpu.memory_space<vmem>>, vector<1x2x8x32xf32>,
    return
  }
  func.func @transform_0(%arg0: i32) -> (i32, i32, i32) {
    %c0_i32 = arith.constant 0 : i32
    %c0_i32_0 = arith.constant 0 : i32
    %c0_i32_1 = arith.constant 0 : i32
    return %arg0, %c0_i32, %c0_i32_0 : i32, i32, i32
  }
  func.func @transform_1(%arg0: i32) -> (i32, i32) {
    %c0_i32 = arith.constant 0 : i32
    %c0_i32_0 = arith.constant 0 : i32
    %c0_i32_1 = arith.constant 0 : i32
    return %c0_i32, %c0_i32_0 : i32, i32
  }
  func.func @transform_2(%arg0: i32) -> (i32, i32) {
    %c0_i32 = arith.constant 0 : i32
    %c0_i32_0 = arith.constant 0 : i32
    %c0_i32_1 = arith.constant 0 : i32
    return %c0_i32, %c0_i32_0 : i32, i32
  }
  func.func @transform_3(%arg0: i32) -> (i32, i32) {
    %c0_i32 = arith.constant 0 : i32
    %c0_i32_0 = arith.constant 0 : i32
    %c0_i32_1 = arith.constant 0 : i32
    return %c0_i32, %c0_i32_0 : i32, i32
  }
  func.func @transform_4(%arg0: i32) -> (i32, i32) {
    %c0_i32 = arith.constant 0 : i32
    %c0_i32_0 = arith.constant 0 : i32
    %c0_i32_1 = arith.constant 0 : i32
    return %c0_i32, %c0_i32_0 : i32, i32
  }
  func.func @transform_5(%arg0: i32) -> (i32, i32) {
    %c0_i32 = arith.constant 0 : i32
    %c0_i32_0 = arith.constant 0 : i32
    %c0_i32_1 = arith.constant 0 : i32
    return %c0_i32, %c0_i32_0 : i32, i32
  }
  func.func @transform_6(%arg0: i32) -> (i32, i32, i32) {
    %c0_i32 = arith.constant 0 : i32
    %c0_i32_0 = arith.constant 0 : i32
    %c0_i32_1 = arith.constant 0 : i32
    return %arg0, %c0_i32, %c0_i32_0 : i32, i32, i32
  }
  func.func @transform_7(%arg0: i32) -> (i32, i32, i32, i32) {
    %c0_i32 = arith.constant 0 : i32
    %c0_i32_0 = arith.constant 0 : i32
    %c0_i32_1 = arith.constant 0 : i32
    %c0_i32_2 = arith.constant 0 : i32
    return %arg0, %c0_i32, %c0_i32_0, %c0_i32_1 : i32, i32, i32, i32
  }
}

</mosaic_0001>

<llo_original>
// kernel: tpu_custom_call.1
$region0: #{tpu_custom_call.1}
  #allocation0 [shape = 'u32[]', space=smem, size = 0x4, offset = 0x4, fixed_abs, tag = 'smem constant byte address 0x4 - core index']
  #allocation1 [shape = 'u32[144,128]{1,0:T(1,128)}', space=vmem, size = 0x12000, scoped, tag = 'internal scratch']
  %s0 = inlined_call_operand.vmem [shape: f32[1,4,512], index: 0, kind: input, shape index: {}]
  %s1 = inlined_call_operand.vmem [shape: f32[36,4], index: 1, kind: input, shape index: {}]
  %s2 = inlined_call_operand.vmem [shape: f32[36,1], index: 2, kind: input, shape index: {}]
  %s3 = inlined_call_operand.vmem [shape: f32[8,32], index: 3, kind: input, shape index: {}]
  %s4 = inlined_call_operand.vmem [shape: f32[8,1], index: 4, kind: input, shape index: {}]
  %s5 = inlined_call_operand.vmem [shape: f32[8,32], index: 5, kind: input, shape index: {}]
  %s6 = inlined_call_operand.hbm [shape: f32[1,4,512], index: 6, kind: output, shape index: {0}]
  %s7 = inlined_call_operand.hbm [shape: f32[1,2,8,32], index: 7, kind: output, shape index: {1}]
  %8 = xla_tuple %s6, %s7
  %s9 = sld [smem:[#allocation0]]
  $region42: #{tpu_custom_call.1} parent=0
    _
  %s11 = ssub.s32 1, %s9
  %s12 = scalar_select 0, %s11, %s9
  $region1: #{tpu_custom_call.1} parent=0
    #allocation2 [shape = 'u8[8192]{0}', space=vmem, size = 0x2000, scoped, tag = 'output window, operand 0, single buffered']
    #allocation3 [shape = 's32[1]{0}', space=sflag, size = 0x4, scoped, tag = 'scoped memory for tpu_custom_call.1']
    #allocation4 [shape = 'u8[8192]{0}', space=vmem, size = 0x2000, scoped, tag = 'output window, operand 1, single buffered']
    #allocation5 [shape = 's32[1]{0}', space=sflag, size = 0x4, scoped, tag = 'scoped memory for tpu_custom_call.1']
    %13 = vsyncpa [#allocation3], 0
    %14 = vsyncpa [#allocation5], 0
    // Predicated region
    $region2: #{tpu_custom_call.1} parent=1 // pred_check
      _
    $region3: #{tpu_custom_call.1} parent=1 // pred_check_branch
      %16 = sbr.rel (0) target = $region5
    $region4: #{tpu_custom_call.1} parent=1 // pred_region
      _
    $region5: #{tpu_custom_call.1} parent=1 // pred_fallthru
      _
    // Predicated region
    $region6: #{tpu_custom_call.1} parent=1 // pred_check
      _
    $region7: #{tpu_custom_call.1} parent=1 // pred_check_branch
      %18 = sbr.rel (0) target = $region9
    $region8: #{tpu_custom_call.1} parent=1 // pred_region
      _
    $region9: #{tpu_custom_call.1} parent=1 // pred_fallthru
      _
    // Predicated region
    $region10: #{tpu_custom_call.1} parent=1 // pred_check
      _
    $region11: #{tpu_custom_call.1} parent=1 // pred_check_branch
      %20 = sbr.rel (0) target = $region13
    $region12: #{tpu_custom_call.1} parent=1 // pred_region
      _
    $region13: #{tpu_custom_call.1} parent=1 // pred_fallthru
      _
    // Predicated region
    $region14: #{tpu_custom_call.1} parent=1 // pred_check
      _
    $region15: #{tpu_custom_call.1} parent=1 // pred_check_branch
      %22 = sbr.rel (0) target = $region17
    $region16: #{tpu_custom_call.1} parent=1 // pred_region
      _
    $region17: #{tpu_custom_call.1} parent=1 // pred_fallthru
      _
    // Predicated region
    $region18: #{tpu_custom_call.1} parent=1 // pred_check
      _
    $region19: #{tpu_custom_call.1} parent=1 // pred_check_branch
      %24 = sbr.rel (0) target = $region21
    $region20: #{tpu_custom_call.1} parent=1 // pred_region
      _
    $region21: #{tpu_custom_call.1} parent=1 // pred_fallthru
      _
    // Predicated region
    $region22: #{tpu_custom_call.1} parent=1 // pred_check
      _
    $region23: #{tpu_custom_call.1} parent=1 // pred_check_branch
      %26 = sbr.rel (0) target = $region25
    $region24: #{tpu_custom_call.1} parent=1 // pred_region
      _
    $region25: #{tpu_custom_call.1} parent=1 // pred_fallthru
      _
    %v29 = vld [vmem:[%s0] sm:$0xff]
    %v30 = vld [vmem:[%s0 + $0x8] sm:$0xff]
    %v31 = vld [vmem:[%s1] sm:$0xff]
    %v32 = vld [vmem:[%s1 + $0x8] sm:$0xff]
    %v33 = vld [vmem:[%s1 + $0x10] sm:$0xff]
    %v34 = vld [vmem:[%s1 + $0x18] sm:$0xff]
    %v35 = vld [vmem:[%s1 + $0x20] sm:$0xf]
    %37 = vset.pattern.permute.xlu0 0
    %38 = vperm.xlu0 %37, %v31
    %v39 = vpop.permute.xlu0 %38
    %42 = vset.pattern.permute.xlu0 0
    %43 = vperm.xlu0 %42, %v32
    %v44 = vpop.permute.xlu0 %43
    %47 = vset.pattern.permute.xlu0 0
    %48 = vperm.xlu0 %47, %v33
    %v49 = vpop.permute.xlu0 %48
    %52 = vset.pattern.permute.xlu0 0
    %53 = vperm.xlu0 %52, %v34
    %v54 = vpop.permute.xlu0 %53
    %57 = vset.pattern.permute.xlu0 0
    %58 = vperm.xlu0 %57, %v35
    %v59 = vpop.permute.xlu0 %58
    %v63 = vlaneseq
    %v64 = vshrl.u32 %v63, 7
    %v65 = vsub.s32 0, %v64
    %v66 = vrot.slane %v29, %v65
    %v67 = vlaneseq
    %v68 = vshrl.u32 %v67, 7
    %v69 = vsub.s32 4, %v68
    %v70 = vrot.slane %v29, %v69
    %v71 = vlaneseq
    %v72 = vshrl.u32 %v71, 7
    %v73 = vsub.s32 0, %v72
    %v74 = vrot.slane %v30, %v73
    %v75 = vlaneseq
    %v76 = vshrl.u32 %v75, 7
    %v77 = vsub.s32 4, %v76
    %v78 = vrot.slane %v30, %v77
    %v83 = vlaneseq
    %v84 = vshrl.u32 %v83, 7
    %v85 = vsub.s32 0, %v84
    %v86 = vrot.slane %v66, %v85
    %v87 = vlaneseq
    %v88 = vshrl.u32 %v87, 7
    %v89 = vsub.s32 0, %v88
    %v90 = vrot.slane %v70, %v89
    %v91 = vlaneseq
    %v92 = vshrl.u32 %v91, 7
    %v93 = vsub.s32 0, %v92
    %v94 = vrot.slane %v74, %v93
    %v95 = vlaneseq
    %v96 = vshrl.u32 %v95, 7
    %v97 = vsub.s32 0, %v96
    %v98 = vrot.slane %v78, %v97
    %v99 = vmul.f32 %v39, %v86
    %v100 = vmul.f32 %v39, %v90
    %v101 = vmul.f32 %v39, %v94
    %v102 = vmul.f32 %v39, %v98
    %v103 = vmul.f32 %v44, %v86
    %v104 = vmul.f32 %v44, %v90
    %v105 = vmul.f32 %v44, %v94
    %v106 = vmul.f32 %v44, %v98
    %v107 = vmul.f32 %v49, %v86
    %v108 = vmul.f32 %v49, %v90
    %v109 = vmul.f32 %v49, %v94
    %v110 = vmul.f32 %v49, %v98
    %v111 = vmul.f32 %v54, %v86
    %v112 = vmul.f32 %v54, %v90
    %v113 = vmul.f32 %v54, %v94
    %v114 = vmul.f32 %v54, %v98
    %v115 = vmul.f32 %v59, %v86
    %v116 = vmul.f32 %v59, %v90
    %v117 = vmul.f32 %v59, %v94
    %v118 = vmul.f32 %v59, %v98
    %119 = vset.pattern.permute.xlu0 1
    %120 = vperm.xlu0 %119, %v31
    %v121 = vpop.permute.xlu0 %120
    %123 = vset.pattern.permute.xlu0 1
    %124 = vperm.xlu0 %123, %v32
    %v125 = vpop.permute.xlu0 %124
    %127 = vset.pattern.permute.xlu0 1
    %128 = vperm.xlu0 %127, %v33
    %v129 = vpop.permute.xlu0 %128
    %131 = vset.pattern.permute.xlu0 1
    %132 = vperm.xlu0 %131, %v34
    %v133 = vpop.permute.xlu0 %132
    %135 = vset.pattern.permute.xlu0 1
    %136 = vperm.xlu0 %135, %v35
    %v137 = vpop.permute.xlu0 %136
    %v139 = vlaneseq
    %v140 = vshrl.u32 %v139, 7
    %v141 = vsub.s32 1, %v140
    %v142 = vrot.slane %v29, %v141
    %v143 = vlaneseq
    %v144 = vshrl.u32 %v143, 7
    %v145 = vsub.s32 5, %v144
    %v146 = vrot.slane %v29, %v145
    %v147 = vlaneseq
    %v148 = vshrl.u32 %v147, 7
    %v149 = vsub.s32 1, %v148
    %v150 = vrot.slane %v30, %v149
    %v151 = vlaneseq
    %v152 = vshrl.u32 %v151, 7
    %v153 = vsub.s32 5, %v152
    %v154 = vrot.slane %v30, %v153
    %v159 = vlaneseq
    %v160 = vshrl.u32 %v159, 7
    %v161 = vsub.s32 1, %v160
    %v162 = vrot.slane %v142, %v161
    %v163 = vlaneseq
    %v164 = vshrl.u32 %v163, 7
    %v165 = vsub.s32 1, %v164
    %v166 = vrot.slane %v146, %v165
    %v167 = vlaneseq
    %v168 = vshrl.u32 %v167, 7
    %v169 = vsub.s32 1, %v168
    %v170 = vrot.slane %v150, %v169
    %v171 = vlaneseq
    %v172 = vshrl.u32 %v171, 7
    %v173 = vsub.s32 1, %v172
    %v174 = vrot.slane %v154, %v173
    %v175 = vmul.f32 %v121, %v162
    %v176 = vmul.f32 %v121, %v166
    %v177 = vmul.f32 %v121, %v170
    %v178 = vmul.f32 %v121, %v174
    %v179 = vmul.f32 %v125, %v162
    %v180 = vmul.f32 %v125, %v166
    %v181 = vmul.f32 %v125, %v170
    %v182 = vmul.f32 %v125, %v174
    %v183 = vmul.f32 %v129, %v162
    %v184 = vmul.f32 %v129, %v166
    %v185 = vmul.f32 %v129, %v170
    %v186 = vmul.f32 %v129, %v174
    %v187 = vmul.f32 %v133, %v162
    %v188 = vmul.f32 %v133, %v166
    %v189 = vmul.f32 %v133, %v170
    %v190 = vmul.f32 %v133, %v174
    %v191 = vmul.f32 %v137, %v162
    %v192 = vmul.f32 %v137, %v166
    %v193 = vmul.f32 %v137, %v170
    %v194 = vmul.f32 %v137, %v174
    %v195 = vadd.f32 %v99, %v175
    %v196 = vadd.f32 %v100, %v176
    %v197 = vadd.f32 %v101, %v177
    %v198 = vadd.f32 %v102, %v178
    %v199 = vadd.f32 %v103, %v179
    %v200 = vadd.f32 %v104, %v180
    %v201 = vadd.f32 %v105, %v181
    %v202 = vadd.f32 %v106, %v182
    %v203 = vadd.f32 %v107, %v183
    %v204 = vadd.f32 %v108, %v184
    %v205 = vadd.f32 %v109, %v185
    %v206 = vadd.f32 %v110, %v186
    %v207 = vadd.f32 %v111, %v187
    %v208 = vadd.f32 %v112, %v188
    %v209 = vadd.f32 %v113, %v189
    %v210 = vadd.f32 %v114, %v190
    %v211 = vadd.f32 %v115, %v191
    %v212 = vadd.f32 %v116, %v192
    %v213 = vadd.f32 %v117, %v193
    %v214 = vadd.f32 %v118, %v194
    %215 = vset.pattern.permute.xlu0 2
    %216 = vperm.xlu0 %215, %v31
    %v217 = vpop.permute.xlu0 %216
    %219 = vset.pattern.permute.xlu0 2
    %220 = vperm.xlu0 %219, %v32
    %v221 = vpop.permute.xlu0 %220
    %223 = vset.pattern.permute.xlu0 2
    %224 = vperm.xlu0 %223, %v33
    %v225 = vpop.permute.xlu0 %224
    %227 = vset.pattern.permute.xlu0 2
    %228 = vperm.xlu0 %227, %v34
    %v229 = vpop.permute.xlu0 %228
    %231 = vset.pattern.permute.xlu0 2
    %232 = vperm.xlu0 %231, %v35
    %v233 = vpop.permute.xlu0 %232
    %v235 = vlaneseq
    %v236 = vshrl.u32 %v235, 7
    %v237 = vsub.s32 2, %v236
    %v238 = vrot.slane %v29, %v237
    %v239 = vlaneseq
    %v240 = vshrl.u32 %v239, 7
    %v241 = vsub.s32 6, %v240
    %v242 = vrot.slane %v29, %v241
    %v243 = vlaneseq
    %v244 = vshrl.u32 %v243, 7
    %v245 = vsub.s32 2, %v244
    %v246 = vrot.slane %v30, %v245
    %v247 = vlaneseq
    %v248 = vshrl.u32 %v247, 7
    %v249 = vsub.s32 6, %v248
    %v250 = vrot.slane %v30, %v249
    %v255 = vlaneseq
    %v256 = vshrl.u32 %v255, 7
    %v257 = vsub.s32 2, %v256
    %v258 = vrot.slane %v238, %v257
    %v259 = vlaneseq
    %v260 = vshrl.u32 %v259, 7
    %v261 = vsub.s32 2, %v260
    %v262 = vrot.slane %v242, %v261
    %v263 = vlaneseq
    %v264 = vshrl.u32 %v263, 7
    %v265 = vsub.s32 2, %v264
    %v266 = vrot.slane %v246, %v265
    %v267 = vlaneseq
    %v268 = vshrl.u32 %v267, 7
    %v269 = vsub.s32 2, %v268
    %v270 = vrot.slane %v250, %v269
    %v271 = vmul.f32 %v217, %v258
    %v272 = vmul.f32 %v217, %v262
    %v273 = vmul.f32 %v217, %v266
    %v274 = vmul.f32 %v217, %v270
    %v275 = vmul.f32 %v221, %v258
    %v276 = vmul.f32 %v221, %v262
    %v277 = vmul.f32 %v221, %v266
    %v278 = vmul.f32 %v221, %v270
    %v279 = vmul.f32 %v225, %v258
    %v280 = vmul.f32 %v225, %v262
    %v281 = vmul.f32 %v225, %v266
    %v282 = vmul.f32 %v225, %v270
    %v283 = vmul.f32 %v229, %v258
    %v284 = vmul.f32 %v229, %v262
    %v285 = vmul.f32 %v229, %v266
    %v286 = vmul.f32 %v229, %v270
    %v287 = vmul.f32 %v233, %v258
    %v288 = vmul.f32 %v233, %v262
    %v289 = vmul.f32 %v233, %v266
    %v290 = vmul.f32 %v233, %v270
    %v291 = vadd.f32 %v195, %v271
    %v292 = vadd.f32 %v196, %v272
    %v293 = vadd.f32 %v197, %v273
    %v294 = vadd.f32 %v198, %v274
    %v295 = vadd.f32 %v199, %v275
    %v296 = vadd.f32 %v200, %v276
    %v297 = vadd.f32 %v201, %v277
    %v298 = vadd.f32 %v202, %v278
    %v299 = vadd.f32 %v203, %v279
    %v300 = vadd.f32 %v204, %v280
    %v301 = vadd.f32 %v205, %v281
    %v302 = vadd.f32 %v206, %v282
    %v303 = vadd.f32 %v207, %v283
    %v304 = vadd.f32 %v208, %v284
    %v305 = vadd.f32 %v209, %v285
    %v306 = vadd.f32 %v210, %v286
    %v307 = vadd.f32 %v211, %v287
    %v308 = vadd.f32 %v212, %v288
    %v309 = vadd.f32 %v213, %v289
    %v310 = vadd.f32 %v214, %v290
    %311 = vset.pattern.permute.xlu0 3
    %312 = vperm.xlu0 %311, %v31
    %v313 = vpop.permute.xlu0 %312
    %315 = vset.pattern.permute.xlu0 3
    %316 = vperm.xlu0 %315, %v32
    %v317 = vpop.permute.xlu0 %316
    %319 = vset.pattern.permute.xlu0 3
    %320 = vperm.xlu0 %319, %v33
    %v321 = vpop.permute.xlu0 %320
    %323 = vset.pattern.permute.xlu0 3
    %324 = vperm.xlu0 %323, %v34
    %v325 = vpop.permute.xlu0 %324
    %327 = vset.pattern.permute.xlu0 3
    %328 = vperm.xlu0 %327, %v35
    %v329 = vpop.permute.xlu0 %328
    %v331 = vlaneseq
    %v332 = vshrl.u32 %v331, 7
    %v333 = vsub.s32 3, %v332
    %v334 = vrot.slane %v29, %v333
    %v335 = vlaneseq
    %v336 = vshrl.u32 %v335, 7
    %v337 = vsub.s32 7, %v336
    %v338 = vrot.slane %v29, %v337
    %v339 = vlaneseq
    %v340 = vshrl.u32 %v339, 7
    %v341 = vsub.s32 3, %v340
    %v342 = vrot.slane %v30, %v341
    %v343 = vlaneseq
    %v344 = vshrl.u32 %v343, 7
    %v345 = vsub.s32 7, %v344
    %v346 = vrot.slane %v30, %v345
    %v351 = vlaneseq
    %v352 = vshrl.u32 %v351, 7
    %v353 = vsub.s32 3, %v352
    %v354 = vrot.slane %v334, %v353
    %v355 = vlaneseq
    %v356 = vshrl.u32 %v355, 7
    %v357 = vsub.s32 3, %v356
    %v358 = vrot.slane %v338, %v357
    %v359 = vlaneseq
    %v360 = vshrl.u32 %v359, 7
    %v361 = vsub.s32 3, %v360
    %v362 = vrot.slane %v342, %v361
    %v363 = vlaneseq
    %v364 = vshrl.u32 %v363, 7
    %v365 = vsub.s32 3, %v364
    %v366 = vrot.slane %v346, %v365
    %v367 = vmul.f32 %v313, %v354
    %v368 = vmul.f32 %v313, %v358
    %v369 = vmul.f32 %v313, %v362
    %v370 = vmul.f32 %v313, %v366
    %v371 = vmul.f32 %v317, %v354
    %v372 = vmul.f32 %v317, %v358
    %v373 = vmul.f32 %v317, %v362
    %v374 = vmul.f32 %v317, %v366
    %v375 = vmul.f32 %v321, %v354
    %v376 = vmul.f32 %v321, %v358
    %v377 = vmul.f32 %v321, %v362
    %v378 = vmul.f32 %v321, %v366
    %v379 = vmul.f32 %v325, %v354
    %v380 = vmul.f32 %v325, %v358
    %v381 = vmul.f32 %v325, %v362
    %v382 = vmul.f32 %v325, %v366
    %v383 = vmul.f32 %v329, %v354
    %v384 = vmul.f32 %v329, %v358
    %v385 = vmul.f32 %v329, %v362
    %v386 = vmul.f32 %v329, %v366
    %v387 = vadd.f32 %v291, %v367
    %v388 = vadd.f32 %v292, %v368
    %v389 = vadd.f32 %v293, %v369
    %v390 = vadd.f32 %v294, %v370
    %v391 = vadd.f32 %v295, %v371
    %v392 = vadd.f32 %v296, %v372
    %v393 = vadd.f32 %v297, %v373
    %v394 = vadd.f32 %v298, %v374
    %v395 = vadd.f32 %v299, %v375
    %v396 = vadd.f32 %v300, %v376
    %v397 = vadd.f32 %v301, %v377
    %v398 = vadd.f32 %v302, %v378
    %v399 = vadd.f32 %v303, %v379
    %v400 = vadd.f32 %v304, %v380
    %v401 = vadd.f32 %v305, %v381
    %v402 = vadd.f32 %v306, %v382
    %v403 = vadd.f32 %v307, %v383
    %v404 = vadd.f32 %v308, %v384
    %v405 = vadd.f32 %v309, %v385
    %v406 = vadd.f32 %v310, %v386
    %v407 = vld [vmem:[%s2] sm:$0xff]
    %v408 = vld [vmem:[%s2 + $0x8] sm:$0xff]
    %v409 = vld [vmem:[%s2 + $0x10] sm:$0xff]
    %v410 = vld [vmem:[%s2 + $0x18] sm:$0xff]
    %v411 = vld [vmem:[%s2 + $0x20] sm:$0xf]
    %413 = vset.pattern.permute.xlu0 0
    %414 = vperm.xlu0 %413, %v407
    %v415 = vpop.permute.xlu0 %414
    %418 = vset.pattern.permute.xlu0 0
    %419 = vperm.xlu0 %418, %v408
    %v420 = vpop.permute.xlu0 %419
    %423 = vset.pattern.permute.xlu0 0
    %424 = vperm.xlu0 %423, %v409
    %v425 = vpop.permute.xlu0 %424
    %428 = vset.pattern.permute.xlu0 0
    %429 = vperm.xlu0 %428, %v410
    %v430 = vpop.permute.xlu0 %429
    %433 = vset.pattern.permute.xlu0 0
    %434 = vperm.xlu0 %433, %v411
    %v435 = vpop.permute.xlu0 %434
    %v437 = vadd.f32 %v387, %v415
    %v438 = vadd.f32 %v388, %v415
    %v439 = vadd.f32 %v389, %v415
    %v440 = vadd.f32 %v390, %v415
    %v441 = vadd.f32 %v391, %v420
    %v442 = vadd.f32 %v392, %v420
    %v443 = vadd.f32 %v393, %v420
    %v444 = vadd.f32 %v394, %v420
    %v445 = vadd.f32 %v395, %v425
    %v446 = vadd.f32 %v396, %v425
    %v447 = vadd.f32 %v397, %v425
    %v448 = vadd.f32 %v398, %v425
    %v449 = vadd.f32 %v399, %v430
    %v450 = vadd.f32 %v400, %v430
    %v451 = vadd.f32 %v401, %v430
    %v452 = vadd.f32 %v402, %v430
    %v453 = vadd.f32 %v403, %v435
    %v454 = vadd.f32 %v404, %v435
    %v455 = vadd.f32 %v405, %v435
    %v456 = vadd.f32 %v406, %v435
    %v457 = vmax.f32 %v437, 0.0
    %v458 = vmax.f32 %v438, 0.0
    %v459 = vmax.f32 %v439, 0.0
    %v460 = vmax.f32 %v440, 0.0
    %v461 = vmax.f32 %v441, 0.0
    %v462 = vmax.f32 %v442, 0.0
    %v463 = vmax.f32 %v443, 0.0
    %v464 = vmax.f32 %v444, 0.0
    %v465 = vmax.f32 %v445, 0.0
    %v466 = vmax.f32 %v446, 0.0
    %v467 = vmax.f32 %v447, 0.0
    %v468 = vmax.f32 %v448, 0.0
    %v469 = vmax.f32 %v449, 0.0
    %v470 = vmax.f32 %v450, 0.0
    %v471 = vmax.f32 %v451, 0.0
    %v472 = vmax.f32 %v452, 0.0
    %v477 = vcombine.low %v453, %v454
    %v478 = vcombine.low %v455, %v456
    %481 = vst [vmem:[#allocation2] sm:$0xff] %v477
    %482 = vst [vmem:[#allocation2 + $0x8] sm:$0xff] %v478
    %v483 = vpack.c.bf16 %v461, %v457
    %v484 = vpack.c.bf16 %v462, %v458
    %v485 = vpack.c.bf16 %v463, %v459
    %v486 = vpack.c.bf16 %v464, %v460
    %v487 = vpack.c.bf16 %v469, %v465
    %v488 = vpack.c.bf16 %v470, %v466
    %v489 = vpack.c.bf16 %v471, %v467
    %v490 = vpack.c.bf16 %v472, %v468
    %v491 = vld [vmem:[%s3] sm:$0xff]
    %v492 = vpack.c.bf16 %v491, %v491
    %v493 = vld [vmem:[%s4] sm:$0xff]
    %495 = vset.pattern.permute.xlu0 0
    %496 = vperm.xlu0 %495, %v493
    %v497 = vpop.permute.xlu0 %496
    %vm499 = vcmask 261120
    %v501 = vsel %vm499, %v492, 0
    %503 = vmatprep.subr.bf16.mxu0 %v484
    %504 = vmatpush1.bf16.msra.mxu0 %v483
    %505 = vmatprep.subr.bf16.mxu0 %v488
    %506 = vmatpush1.bf16.msra.mxu0 %v487
    %507 = vmatprep.subr.bf16.mxu0 0
    %508 = vmatpush1.bf16.msra.mxu0 0
    %509 = vmatprep.subr.bf16.mxu0 0
    %510 = vmatpush1.bf16.msra.mxu0 0
    %511 = vmatprep.subr.bf16.mxu0 0
    %512 = vmatpush1.bf16.msra.mxu0 0
    %513 = vmatprep.subr.bf16.mxu0 0
    %514 = vmatpush1.bf16.msra.mxu0 0
    %515 = vmatprep.subr.bf16.mxu0 0
    %516 = vmatpush1.bf16.msra.mxu0 0
    %517 = vmatprep.subr.bf16.mxu0 0
    %518 = vmatpush1.bf16.msra.mxu0 0
    %519 = vmatprep.subr.bf16.mxu0 0
    %520 = vmatpush1.bf16.msra.mxu0 0
    %521 = vmatprep.subr.bf16.mxu0 0
    %522 = vmatpush1.bf16.msra.mxu0 0
    %523 = vmatprep.subr.bf16.mxu0 0
    %524 = vmatpush1.bf16.msra.mxu0 0
    %525 = vmatprep.subr.bf16.mxu0 0
    %526 = vmatpush1.bf16.msra.mxu0 0
    %527 = vmatprep.subr.bf16.mxu0 0
    %528 = vmatpush1.bf16.msra.mxu0 0
    %529 = vmatprep.subr.bf16.mxu0 0
    %530 = vmatpush1.bf16.msra.mxu0 0
    %531 = vmatprep.subr.bf16.mxu0 0
    %532 = vmatpush1.bf16.msra.mxu0 0
    %533 = vmatprep.subr.bf16.mxu0 0
    %534 = vmatpush1.bf16.msra.mxu0 0
    %535 = vmatprep.mubr.bf16.mxu0 0
    %536 = vmatmul.mubr.bf16.gmra.mrb[0].mxu0 %v501
    %v537 = vpop.f32.mrb[0].mxu0
    %v538 = vadd.f32 %v497, %v537
    %v539 = vpop.f32.mrb[0].mxu0
    %v540 = vadd.f32 %v497, %v539
    %v541 = vpop.f32.mrb[0].mxu0
    %v542 = vpop.f32.mrb[0].mxu0
    %543 = vdwg.mxu0
    %544 = vmatprep.subr.bf16.mxu0 %v486
    %545 = vmatpush1.bf16.msra.mxu0 %v485
    %546 = vmatprep.subr.bf16.mxu0 %v490
    %547 = vmatpush1.bf16.msra.mxu0 %v489
    %548 = vmatprep.subr.bf16.mxu0 0
    %549 = vmatpush1.bf16.msra.mxu0 0
    %550 = vmatprep.subr.bf16.mxu0 0
    %551 = vmatpush1.bf16.msra.mxu0 0
    %552 = vmatprep.subr.bf16.mxu0 0
    %553 = vmatpush1.bf16.msra.mxu0 0
    %554 = vmatprep.subr.bf16.mxu0 0
    %555 = vmatpush1.bf16.msra.mxu0 0
    %556 = vmatprep.subr.bf16.mxu0 0
    %557 = vmatpush1.bf16.msra.mxu0 0
    %558 = vmatprep.subr.bf16.mxu0 0
    %559 = vmatpush1.bf16.msra.mxu0 0
    %560 = vmatprep.subr.bf16.mxu0 0
    %561 = vmatpush1.bf16.msra.mxu0 0
    %562 = vmatprep.subr.bf16.mxu0 0
    %563 = vmatpush1.bf16.msra.mxu0 0
    %564 = vmatprep.subr.bf16.mxu0 0
    %565 = vmatpush1.bf16.msra.mxu0 0
    %566 = vmatprep.subr.bf16.mxu0 0
    %567 = vmatpush1.bf16.msra.mxu0 0
    %568 = vmatprep.subr.bf16.mxu0 0
    %569 = vmatpush1.bf16.msra.mxu0 0
    %570 = vmatprep.subr.bf16.mxu0 0
    %571 = vmatpush1.bf16.msra.mxu0 0
    %572 = vmatprep.subr.bf16.mxu0 0
    %573 = vmatpush1.bf16.msra.mxu0 0
    %574 = vmatprep.subr.bf16.mxu0 0
    %575 = vmatpush1.bf16.msra.mxu0 0
    %576 = vmatprep.mubr.bf16.mxu0 0
    %577 = vmatmul.mubr.bf16.gmra.mrb[0].mxu0 %v501
    %v578 = vpop.f32.mrb[0].mxu0
    %v579 = vadd.f32 %v497, %v578
    %v580 = vpop.f32.mrb[0].mxu0
    %v581 = vadd.f32 %v497, %v580
    %v582 = vpop.f32.mrb[0].mxu0
    %v583 = vpop.f32.mrb[0].mxu0
    %584 = vdwg.mxu0
    %v585 = vrot.slane %v538, 4
    %v586 = vmax.f32 %v538, %v585
    %v587 = vrot.slane %v586, 2
    %v588 = vmax.f32 %v586, %v587
    %v589 = vrot.slane %v588, 1
    %v590 = vmax.f32 %v588, %v589
    %v591 = vrot.slane %v540, 4
    %v592 = vmax.f32 %v540, %v591
    %v593 = vrot.slane %v592, 2
    %v594 = vmax.f32 %v592, %v593
    %v595 = vrot.slane %v594, 1
    %v596 = vmax.f32 %v594, %v595
    %v597 = vrot.slane %v579, 4
    %v598 = vmax.f32 %v579, %v597
    %v599 = vrot.slane %v598, 2
    %v600 = vmax.f32 %v598, %v599
    %v601 = vrot.slane %v600, 1
    %v602 = vmax.f32 %v600, %v601
    %v603 = vrot.slane %v581, 4
    %v604 = vmax.f32 %v581, %v603
    %v605 = vrot.slane %v604, 2
    %v606 = vmax.f32 %v604, %v605
    %v607 = vrot.slane %v606, 1
    %v608 = vmax.f32 %v606, %v607
    %v609 = vsub.f32 %v538, %v590
    %v610 = vsub.f32 %v540, %v596
    %v611 = vsub.f32 %v579, %v602
    %v612 = vsub.f32 %v581, %v608
    %v613 = vmul.f32 %v609, 1.442695
    %v614 = vpow.pop %v613
    %v615 = vmul.f32 %v610, 1.442695
    %v616 = vpow.pop %v615
    %v617 = vmul.f32 %v611, 1.442695
    %v618 = vpow.pop %v617
    %v619 = vmul.f32 %v612, 1.442695
    %v620 = vpow.pop %v619
    %v621 = vrot.slane %v614, 4
    %v622 = vadd.f32 %v614, %v621
    %v623 = vrot.slane %v622, 2
    %v624 = vadd.f32 %v622, %v623
    %v625 = vrot.slane %v624, 1
    %v626 = vadd.f32 %v624, %v625
    %v627 = vrot.slane %v616, 4
    %v628 = vadd.f32 %v616, %v627
    %v629 = vrot.slane %v628, 2
    %v630 = vadd.f32 %v628, %v629
    %v631 = vrot.slane %v630, 1
    %v632 = vadd.f32 %v630, %v631
    %v633 = vrot.slane %v618, 4
    %v634 = vadd.f32 %v618, %v633
    %v635 = vrot.slane %v634, 2
    %v636 = vadd.f32 %v634, %v635
    %v637 = vrot.slane %v636, 1
    %v638 = vadd.f32 %v636, %v637
    %v639 = vrot.slane %v620, 4
    %v640 = vadd.f32 %v620, %v639
    %v641 = vrot.slane %v640, 2
    %v642 = vadd.f32 %v640, %v641
    %v643 = vrot.slane %v642, 1
    %v644 = vadd.f32 %v642, %v643
    %v645 = vrcp.pop %v626
    %v646 = vrcp.pop %v632
    %v647 = vrcp.pop %v638
    %v648 = vrcp.pop %v644
    %v649 = vmul.f32 %v614, %v645
    %v650 = vmul.f32 %v616, %v646
    %v651 = vmul.f32 %v618, %v647
    %v652 = vmul.f32 %v620, %v648
    %v653 = vpack.c.bf16 %v649, %v649
    %v654 = vpack.c.bf16 %v650, %v650
    %v655 = vpack.c.bf16 %v651, %v651
    %v656 = vpack.c.bf16 %v652, %v652
    %v657 = vld [vmem:[%s5] sm:$0xff]
    %658 = vmatprep.subr.bf16.mxu0 %v484
    %659 = vmatpush1.bf16.xpose.msra.mxu0 %v483
    %660 = vmatprep.subr.bf16.mxu0 %v488
    %661 = vmatpush1.bf16.xpose.msra.mxu0 %v487
    %662 = vmatprep.subr.bf16.mxu0 1065369472
    %663 = vmatpush1.bf16.xpose.msra.mxu0 1065369472
    %664 = vmatprep.subr.bf16.mxu0 0
    %665 = vmatpush1.bf16.xpose.msra.mxu0 0
    %666 = vmatprep.subr.bf16.mxu0 0
    %667 = vmatpush1.bf16.xpose.msra.mxu0 0
    %668 = vmatprep.subr.bf16.mxu0 0
    %669 = vmatpush1.bf16.xpose.msra.mxu0 0
    %670 = vmatprep.subr.bf16.mxu0 0
    %671 = vmatpush1.bf16.xpose.msra.mxu0 0
    %672 = vmatprep.subr.bf16.mxu0 0
    %673 = vmatpush1.bf16.xpose.msra.mxu0 0
    %674 = vmatprep.subr.bf16.mxu0 0
    %675 = vmatpush1.bf16.xpose.msra.mxu0 0
    %676 = vmatprep.subr.bf16.mxu0 0
    %677 = vmatpush1.bf16.xpose.msra.mxu0 0
    %678 = vmatprep.subr.bf16.mxu0 0
    %679 = vmatpush1.bf16.xpose.msra.mxu0 0
    %680 = vmatprep.subr.bf16.mxu0 0
    %681 = vmatpush1.bf16.xpose.msra.mxu0 0
    %682 = vmatprep.subr.bf16.mxu0 0
    %683 = vmatpush1.bf16.xpose.msra.mxu0 0
    %684 = vmatprep.subr.bf16.mxu0 0
    %685 = vmatpush1.bf16.xpose.msra.mxu0 0
    %686 = vmatprep.subr.bf16.mxu0 0
    %687 = vmatpush1.bf16.xpose.msra.mxu0 0
    %688 = vmatprep.subr.bf16.mxu0 0
    %689 = vmatpush1.bf16.xpose.msra.mxu0 0
    %690 = vmatprep.mubr.bf16.mxu0 %v654
    %691 = vmatmul.mubr.bf16.gmra.mrb[0].mxu0 %v653
    %v692 = vpop.f32.mrb[0].mxu0
    %v693 = vadd.f32 0.0, %v692
    %v694 = vpop.f32.mrb[0].mxu0
    %v695 = vpop.f32.mrb[0].mxu0
    %v696 = vpop.f32.mrb[0].mxu0
    %697 = vdwg.mxu0
    %699 = vset.pattern.permute.xlu0 32
    %700 = vperm.xlu0 %699, %v693
    %v701 = vpop.permute.xlu0 %700
    %v703 = vmul.f32 %v701, %v657
    %v704 = vsub.f32 %v693, %v703
    %v705 = vmul.f32 %v704, %v704
    %v706 = vsel %vm499, %v705, 0.0
    %707 = vadd.xlane.f32.xlu0 %v706
    %v708 = vpop.xlane.xlu0 %707
    %v709 = vmax.f32 %v708, 1e-24
    %v710 = vrsqrt.pop %v709
    %v711 = vmul.f32 %v704, %v710
    %v712 = vmul.f32 %v711, %v711
    %v713 = vsel %vm499, %v712, 0.0
    %714 = vadd.xlane.f32.xlu0 %v713
    %v715 = vpop.xlane.xlu0 %714
    %v716 = vrot.slane %v715, 4
    %v717 = vadd.f32 %v715, %v716
    %v718 = vrot.slane %v717, 2
    %v719 = vadd.f32 %v717, %v718
    %v720 = vrot.slane %v719, 1
    %v721 = vadd.f32 %v719, %v720
    %s722 = vtos %v721
    %s723 = smax.f32 %s722, 1e-24
    %v724 = vstv %s723
    %v725 = vrsqrt.pop %v724
    %s726 = vtos %v725
    %v727 = vstv %s726
    %v728 = vmul.f32 %v711, %v727
    %729 = vmatprep.subr.bf16.mxu0 %v486
    %730 = vmatpush1.bf16.xpose.msra.mxu0 %v485
    %731 = vmatprep.subr.bf16.mxu0 %v490
    %732 = vmatpush1.bf16.xpose.msra.mxu0 %v489
    %733 = vmatprep.subr.bf16.mxu0 1065369472
    %734 = vmatpush1.bf16.xpose.msra.mxu0 1065369472
    %735 = vmatprep.subr.bf16.mxu0 0
    %736 = vmatpush1.bf16.xpose.msra.mxu0 0
    %737 = vmatprep.subr.bf16.mxu0 0
    %738 = vmatpush1.bf16.xpose.msra.mxu0 0
    %739 = vmatprep.subr.bf16.mxu0 0
    %740 = vmatpush1.bf16.xpose.msra.mxu0 0
    %741 = vmatprep.subr.bf16.mxu0 0
    %742 = vmatpush1.bf16.xpose.msra.mxu0 0
    %743 = vmatprep.subr.bf16.mxu0 0
    %744 = vmatpush1.bf16.xpose.msra.mxu0 0
    %745 = vmatprep.subr.bf16.mxu0 0
    %746 = vmatpush1.bf16.xpose.msra.mxu0 0
    %747 = vmatprep.subr.bf16.mxu0 0
    %748 = vmatpush1.bf16.xpose.msra.mxu0 0
    %749 = vmatprep.subr.bf16.mxu0 0
    %750 = vmatpush1.bf16.xpose.msra.mxu0 0
    %751 = vmatprep.subr.bf16.mxu0 0
    %752 = vmatpush1.bf16.xpose.msra.mxu0 0
    %753 = vmatprep.subr.bf16.mxu0 0
    %754 = vmatpush1.bf16.xpose.msra.mxu0 0
    %755 = vmatprep.subr.bf16.mxu0 0
    %756 = vmatpush1.bf16.xpose.msra.mxu0 0
    %757 = vmatprep.subr.bf16.mxu0 0
    %758 = vmatpush1.bf16.xpose.msra.mxu0 0
    %759 = vmatprep.subr.bf16.mxu0 0
    %760 = vmatpush1.bf16.xpose.msra.mxu0 0
    %761 = vmatprep.mubr.bf16.mxu0 %v656
    %762 = vmatmul.mubr.bf16.gmra.mrb[0].mxu0 %v655
    %v763 = vpop.f32.mrb[0].mxu0
    %v764 = vadd.f32 0.0, %v763
    %v765 = vpop.f32.mrb[0].mxu0
    %v766 = vpop.f32.mrb[0].mxu0
    %v767 = vpop.f32.mrb[0].mxu0
    %768 = vdwg.mxu0
    %770 = vset.pattern.permute.xlu0 32
    %771 = vperm.xlu0 %770, %v764
    %v772 = vpop.permute.xlu0 %771
    %v774 = vmul.f32 %v772, %v657
    %v775 = vsub.f32 %v764, %v774
    %v776 = vmul.f32 %v775, %v775
    %v777 = vsel %vm499, %v776, 0.0
    %778 = vadd.xlane.f32.xlu0 %v777
    %v779 = vpop.xlane.xlu0 %778
    %v780 = vmax.f32 %v779, 1e-24
    %v781 = vrsqrt.pop %v780
    %v782 = vmul.f32 %v775, %v781
    %v783 = vmul.f32 %v782, %v782
    %v784 = vsel %vm499, %v783, 0.0
    %785 = vadd.xlane.f32.xlu0 %v784
    %v786 = vpop.xlane.xlu0 %785
    %v787 = vrot.slane %v786, 4
    %v788 = vadd.f32 %v786, %v787
    %v789 = vrot.slane %v788, 2
    %v790 = vadd.f32 %v788, %v789
    %v791 = vrot.slane %v790, 1
    %v792 = vadd.f32 %v790, %v791
    %s793 = vtos %v792
    %s794 = smax.f32 %s793, 1e-24
    %v795 = vstv %s794
    %v796 = vrsqrt.pop %v795
    %s797 = vtos %v796
    %v798 = vstv %s797
    %v799 = vmul.f32 %v782, %v798
    %800 = vst.msk [vmem:[#allocation4] sm:$0xff] %vm499, %v728
    %801 = vst.msk [vmem:[#allocation4 + $0x8] sm:$0xff] %vm499, %v799
    // Predicated region
    $region26: #{tpu_custom_call.1} parent=1 // pred_check
      _
    $region27: #{tpu_custom_call.1} parent=1 // pred_check_branch
      %803 = sbr.rel (0) target = $region29
    $region28: #{tpu_custom_call.1} parent=1 // pred_region
      %s805 = ssub.s32 256, 256
      %806 = vsyncadd [#allocation3], %s805
      %s808 = sshll.u32 [#allocation2], 4
      %s809 = int_to_ptr.vmem [resolvable:$true] %s808
      %811 = dma.vmem_to_hbm [thread:$0]  %s809, 256, %s6, [#allocation3]
    $region29: #{tpu_custom_call.1} parent=1 // pred_fallthru
      _
    // Predicated region
    $region30: #{tpu_custom_call.1} parent=1 // pred_check
      _
    $region31: #{tpu_custom_call.1} parent=1 // pred_check_branch
      %813 = sbr.rel (0) target = $region33
    $region32: #{tpu_custom_call.1} parent=1 // pred_region
      %s815 = ssub.s32 256, 256
      %816 = vsyncadd [#allocation5], %s815
      %s817 = sshll.u32 [#allocation4], 4
      %s818 = int_to_ptr.vmem [resolvable:$true] %s817
      %823 = dma.vmem_to_hbm [thread:$0]  %s818, 256, %s7, [#allocation5], 128, 128, 8
    $region33: #{tpu_custom_call.1} parent=1 // pred_fallthru
      _
    // Predicated region
    $region34: #{tpu_custom_call.1} parent=1 // pred_check
      _
    $region35: #{tpu_custom_call.1} parent=1 // pred_check_branch
      %825 = sbr.rel (0) target = $region37
    $region36: #{tpu_custom_call.1} parent=1 // pred_region
      %826 = dma.done [#allocation3], 256
    $region37: #{tpu_custom_call.1} parent=1 // pred_fallthru
      _
    // Predicated region
    $region38: #{tpu_custom_call.1} parent=1 // pred_check
      _
    $region39: #{tpu_custom_call.1} parent=1 // pred_check_branch
      %828 = sbr.rel (0) target = $region41
    $region40: #{tpu_custom_call.1} parent=1 // pred_region
      %829 = dma.done [#allocation5], 256
    $region41: #{tpu_custom_call.1} parent=1 // pred_fallthru
      _
    %830 = vsyncpa [#allocation3], 1
    %831 = vsyncpa [#allocation5], 1

</llo_original>
